<compile_context>
chip_gen: v5e
topology: v5e:2x2
jax: 0.10.0
libtpu: 0.0.40
codegen_flags: <defaults>
</compile_context>

<pallas_src>
import functools

import jax
import jax.numpy as jnp
from jax.experimental import pallas as pl
from jax.experimental.pallas import tpu as pltpu


# ---------------------------------------------------------------------------
# Pallas kernel: fused double-Q MLP on one batch tile
# ---------------------------------------------------------------------------
def fused_double_q_kernel(s_ref, a_ref,
                          w1s_ref, w1a_ref, b1_ref,
                          w2_ref, b2_ref,
                          w3_ref, b3_ref,
                          q_ref):
    s = s_ref[...]
    a = a_ref[...]

    # Layer 1 (split contraction == concat([state, action]) @ W1f), f32 accum.
    h = (jnp.dot(s.astype(w1s_ref.dtype), w1s_ref[...],
                 preferred_element_type=jnp.float32)
         + jnp.dot(a.astype(w1a_ref.dtype), w1a_ref[...],
                   preferred_element_type=jnp.float32)
         + b1_ref[...])
    h = jnp.maximum(h, 0.0)                       # f32 elementwise (v5e friendly)

    # Layer 2 (block-diagonal -> the two nets stay independent).
    h = jnp.dot(h.astype(w2_ref.dtype), w2_ref[...],
                preferred_element_type=jnp.float32) + b2_ref[...]
    h = jnp.maximum(h, 0.0)

    # Layer 3 -> (tile_b, 2): col 0 is q1, col 1 is q2. Single store.
    q = jnp.dot(h.astype(w3_ref.dtype), w3_ref[...],
                preferred_element_type=jnp.float32) + b3_ref[...]
    q_ref[...] = q.astype(q_ref.dtype)


# ---------------------------------------------------------------------------
# One-time parameter fusion (do this once, outside the hot path)
# ---------------------------------------------------------------------------
def fuse_double_q_params(params, state_dim, compute_dtype=jnp.float32):
    """params = (w1a,b1a,w2a,b2a,w3a,b3a, w1b,b1b,w2b,b2b,w3b,b3b),
    each W stored as (in_features, out_features), b as (1, out_features)."""
    (w1a, b1a, w2a, b2a, w3a, b3a,
     w1b, b1b, w2b, b2b, w3b, b3b) = params

    # Layer 1: concat along output axis, then split rows into state/action parts.
    w1 = jnp.concatenate([w1a, w1b], axis=1)              # (in, 2*H1)
    w1_state = w1[:state_dim]                             # (state_dim, 2*H1)
    w1_action = w1[state_dim:]                            # (action_dim, 2*H1)
    b1 = jnp.concatenate([b1a, b1b], axis=1)              # (1, 2*H1)

    # Layer 2: block diagonal so the two networks do not mix.
    z12 = jnp.zeros((w2a.shape[0], w2b.shape[1]), w2a.dtype)
    z21 = jnp.zeros((w2b.shape[0], w2a.shape[1]), w2a.dtype)
    w2 = jnp.block([[w2a, z12], [z21, w2b]])              # (2*H1, 2*H2)
    b2 = jnp.concatenate([b2a, b2b], axis=1)              # (1, 2*H2)

    # Layer 3: q1 from first H2 rows -> column 0, q2 from last H2 rows -> column 1.
    z3a = jnp.zeros_like(w3a)
    z3b = jnp.zeros_like(w3b)
    w3 = jnp.block([[w3a, z3b], [z3a, w3b]])              # (2*H2, 2)
    b3 = jnp.concatenate([b3a, b3b], axis=1)              # (1, 2)

    # Optional bf16 weights (v6e/v7x); biases stay f32 for the f32 accum path.
    cd = compute_dtype
    return (w1_state.astype(cd), w1_action.astype(cd), b1.astype(jnp.float32),
            w2.astype(cd), b2.astype(jnp.float32),
            w3.astype(cd), b3.astype(jnp.float32))


# ---------------------------------------------------------------------------
# Wrapper: batch-gridded pallas_call, weights VMEM-resident across grid steps
# ---------------------------------------------------------------------------
@functools.partial(jax.jit, static_argnames=("block_b",))
def double_q_critic(state, action, fused_params, *, block_b=512):
    w1s, w1a, b1, w2, b2, w3, b3 = fused_params
    B = state.shape[0]
    state = state.astype(jnp.float32)
    action = action.astype(jnp.float32)

    if B <= block_b:
        bb, Bp = B, B                       # single full-extent batch block
    else:
        bb = block_b
        Bp = pl.cdiv(B, bb) * bb
        pad = Bp - B
        if pad:
            state = jnp.pad(state, ((0, pad), (0, 0)))
            action = jnp.pad(action, ((0, pad), (0, 0)))

    sdim, adim = state.shape[1], action.shape[1]

    def resident(arr):
        # Whole-array block, constant index_map -> stays in VMEM across the grid.
        return pl.BlockSpec(arr.shape, lambda i: (0, 0))

    q = pl.pallas_call(
        fused_double_q_kernel,
        out_shape=jax.ShapeDtypeStruct((Bp, 2), jnp.float32),
        grid=(Bp // bb,),
        in_specs=[
            pl.BlockSpec((bb, sdim), lambda i: (i, 0)),   # state tile
            pl.BlockSpec((bb, adim), lambda i: (i, 0)),   # action tile
            resident(w1s), resident(w1a), resident(b1),
            resident(w2), resident(b2),
            resident(w3), resident(b3),
        ],
        out_specs=pl.BlockSpec((bb, 2), lambda i: (i, 0)),
        compiler_params=pltpu.CompilerParams(
            dimension_semantics=("parallel",)),           # megacore on v7x
    )(state, action, w1s, w1a, b1, w2, b2, w3, b3)

    q = q[:B]
    return q[:, 0:1], q[:, 1:2]


# ---------------------------------------------------------------------------
# Deterministic parameter init (mimics nn.Linear default: U(-1/sqrt(fan_in), ..))
# ---------------------------------------------------------------------------
def init_linear(key, fan_in, fan_out):
    kw, kb = jax.random.split(key)
    bound = 1.0 / jnp.sqrt(fan_in)
    w = jax.random.uniform(kw, (fan_in, fan_out), jnp.float32, -bound, bound)
    b = jax.random.uniform(kb, (1, fan_out), jnp.float32, -bound, bound)
    return w, b


def init_double_q_params(key, state_dim, action_dim, hid_shape):
    layers = [state_dim + action_dim] + list(hid_shape) + [1]
    params = []
    for _net in range(2):  # Q_1 and Q_2
        for j in range(len(layers) - 1):
            key, sub = jax.random.split(key)
            w, b = init_linear(sub, layers[j], layers[j + 1])
            params += [w, b]
    return tuple(params)


# ---------------------------------------------------------------------------
# Pure-JAX reference (unfused, matches the PyTorch module)
# ---------------------------------------------------------------------------
def reference(state, action, params):
    sa = jnp.concatenate([state, action], axis=1).astype(jnp.float32)

    def mlp(p):
        w1, b1, w2, b2, w3, b3 = p
        h = jnp.maximum(sa @ w1 + b1, 0.0)
        h = jnp.maximum(h @ w2 + b2, 0.0)
        return h @ w3 + b3

    return mlp(params[:6]), mlp(params[6:])


if __name__ == "__main__":
    state_dim, action_dim = 16, 8
    hid_shape = (32, 32)

    key = jax.random.PRNGKey(0)
    k_state, k_action, k_params = jax.random.split(key, 3)
    params = init_double_q_params(k_params, state_dim, action_dim, hid_shape)
    fused = fuse_double_q_params(params, state_dim)  # f32; pass jnp.bfloat16 on v6e/v7x

    # Small batch: single full-extent block (no grid padding).
    batch = 8
    state = jax.random.normal(k_state, (batch, state_dim), jnp.float32)
    action = jax.random.normal(k_action, (batch, action_dim), jnp.float32)

    q1, q2 = double_q_critic(state, action, fused)
    jax.block_until_ready((q1, q2))
    q1_ref, q2_ref = reference(state, action, params)
    assert q1.shape == (batch, 1) and q2.shape == (batch, 1)
    assert jnp.allclose(q1, q1_ref, atol=1e-5), "q1 mismatch (small batch)"
    assert jnp.allclose(q2, q2_ref, atol=1e-5), "q2 mismatch (small batch)"

    # Larger, non-multiple batch: exercises the batch grid + padding path.
    batch2 = 272
    k_s2, k_a2 = jax.random.split(jax.random.PRNGKey(1))
    state2 = jax.random.normal(k_s2, (batch2, state_dim), jnp.float32)
    action2 = jax.random.normal(k_a2, (batch2, action_dim), jnp.float32)

    q1b, q2b = double_q_critic(state2, action2, fused, block_b=128)
    jax.block_until_ready((q1b, q2b))
    q1b_ref, q2b_ref = reference(state2, action2, params)
    assert q1b.shape == (batch2, 1) and q2b.shape == (batch2, 1)
    assert jnp.allclose(q1b, q1b_ref, atol=1e-5), "q1 mismatch (gridded batch)"
    assert jnp.allclose(q2b, q2b_ref, atol=1e-5), "q2 mismatch (gridded batch)"

    print("KERNEL_OK")
</pallas_src>

<mosaic_0001>
module attributes {stable_mosaic.version = 11 : i64} {
  func.func @fused_double_q_kernel(%arg0: i32, %arg1: memref<8x16xf32, #tpu.memory_space<vmem>>, %arg2: memref<8x8xf32, #tpu.memory_space<vmem>>, %arg3: memref<16x64xf32, #tpu.memory_space<vmem>>, %arg4: memref<8x64xf32, #tpu.memory_space<vmem>>, %arg5: memref<1x64xf32, #tpu.memory_space<vmem>>, %arg6: memref<64x64xf32, #tpu.memory_space<vmem>>, %arg7: memref<1x64xf32, #tpu.memory_space<vmem>>, %arg8: memref<64x2xf32, #tpu.memory_space<vmem>>, %arg9: memref<1x2xf32, #tpu.memory_space<vmem>>, %arg10: memref<8x2xf32, #tpu.memory_space<vmem>>) attributes {dimension_semantics = [#tpu.dimension_semantics<parallel>], iteration_bounds = array<i64: 1>, scalar_prefetch = 0 : i64, scratch_operands = 0 : i64, tpu.core_type = #tpu.core_type<tc>, window_params = [{transform_indices = @transform_0, window_bounds = array<i64: 8, 16>}, {transform_indices = @transform_1, window_bounds = array<i64: 8, 8>}, {pipeline_mode = #tpu.pipeline_mode<synchronous>, transform_indices = @transform_2, window_bounds = array<i64: 16, 64>}, {pipeline_mode = #tpu.pipeline_mode<synchronous>, transform_indices = @transform_3, window_bounds = array<i64: 8, 64>}, {pipeline_mode = #tpu.pipeline_mode<synchronous>, transform_indices = @transform_4, window_bounds = array<i64: 1, 64>}, {pipeline_mode = #tpu.pipeline_mode<synchronous>, transform_indices = @transform_5, window_bounds = array<i64: 64, 64>}, {pipeline_mode = #tpu.pipeline_mode<synchronous>, transform_indices = @transform_6, window_bounds = array<i64: 1, 64>}, {pipeline_mode = #tpu.pipeline_mode<synchronous>, transform_indices = @transform_7, window_bounds = array<i64: 64, 2>}, {pipeline_mode = #tpu.pipeline_mode<synchronous>, transform_indices = @transform_8, window_bounds = array<i64: 1, 2>}, {transform_indices = @transform_9, window_bounds = array<i64: 8, 2>}]} {
    %c0 = arith.constant 0 : index
    %c0_0 = arith.constant 0 : index
    %0 = vector.load %arg1[%c0, %c0_0] : memref<8x16xf32, #tpu.memory_space<vmem>>, vector<8x16xf32>
    %c0_1 = arith.constant 0 : index
    %c0_2 = arith.constant 0 : index
    %1 = vector.load %arg2[%c0_1, %c0_2] : memref<8x8xf32, #tpu.memory_space<vmem>>, vector<8x8xf32>
    %c0_3 = arith.constant 0 : index
    %c0_4 = arith.constant 0 : index
    %2 = vector.load %arg3[%c0_3, %c0_4] : memref<16x64xf32, #tpu.memory_space<vmem>>, vector<16x64xf32>
    %cst = arith.constant dense<0.000000e+00> : vector<8x64xf32>
    %3 = tpu.matmul %0, %2, %cst {dimension_numbers = #tpu.dot_dimension_numbers<[1], [0], [0], [1], [0, 0, 1, 1], [], []>} : vector<8x16xf32>, vector<16x64xf32>, vector<8x64xf32> -> vector<8x64xf32>
    %c0_5 = arith.constant 0 : index
    %c0_6 = arith.constant 0 : index
    %4 = vector.load %arg4[%c0_5, %c0_6] : memref<8x64xf32, #tpu.memory_space<vmem>>, vector<8x64xf32>
    %cst_7 = arith.constant dense<0.000000e+00> : vector<8x64xf32>
    %5 = tpu.matmul %1, %4, %cst_7 {dimension_numbers = #tpu.dot_dimension_numbers<[1], [0], [0], [1], [0, 0, 1, 1], [], []>} : vector<8x8xf32>, vector<8x64xf32>, vector<8x64xf32> -> vector<8x64xf32>
    %6 = arith.addf %3, %5 : vector<8x64xf32>
    %c0_8 = arith.constant 0 : index
    %c0_9 = arith.constant 0 : index
    %7 = vector.load %arg5[%c0_8, %c0_9] : memref<1x64xf32, #tpu.memory_space<vmem>>, vector<1x64xf32>
    %8 = vector.broadcast %7 : vector<1x64xf32> to vector<8x64xf32>
    %9 = arith.addf %6, %8 : vector<8x64xf32>
    %cst_10 = arith.constant 0.000000e+00 : f32
    %10 = vector.broadcast %cst_10 : f32 to vector<8x64xf32>
    %11 = arith.maximumf %9, %10 : vector<8x64xf32>
    %c0_11 = arith.constant 0 : index
    %c0_12 = arith.constant 0 : index
    %12 = vector.load %arg6[%c0_11, %c0_12] : memref<64x64xf32, #tpu.memory_space<vmem>>, vector<64x64xf32>
    %cst_13 = arith.constant dense<0.000000e+00> : vector<8x64xf32>
    %13 = tpu.matmul %11, %12, %cst_13 {dimension_numbers = #tpu.dot_dimension_numbers<[1], [0], [0], [1], [0, 0, 1, 1], [], []>} : vector<8x64xf32>, vector<64x64xf32>, vector<8x64xf32> -> vector<8x64xf32>
    %c0_14 = arith.constant 0 : index
    %c0_15 = arith.constant 0 : index
    %14 = vector.load %arg7[%c0_14, %c0_15] : memref<1x64xf32, #tpu.memory_space<vmem>>, vector<1x64xf32>
    %15 = vector.broadcast %14 : vector<1x64xf32> to vector<8x64xf32>
    %16 = arith.addf %13, %15 : vector<8x64xf32>
    %cst_16 = arith.constant 0.000000e+00 : f32
    %17 = vector.broadcast %cst_16 : f32 to vector<8x64xf32>
    %18 = arith.maximumf %16, %17 : vector<8x64xf32>
    %c0_17 = arith.constant 0 : index
    %c0_18 = arith.constant 0 : index
    %19 = vector.load %arg8[%c0_17, %c0_18] : memref<64x2xf32, #tpu.memory_space<vmem>>, vector<64x2xf32>
    %cst_19 = arith.constant dense<0.000000e+00> : vector<8x2xf32>
    %20 = tpu.matmul %18, %19, %cst_19 {dimension_numbers = #tpu.dot_dimension_numbers<[1], [0], [0], [1], [0, 0, 1, 1], [], []>} : vector<8x64xf32>, vector<64x2xf32>, vector<8x2xf32> -> vector<8x2xf32>
    %c0_20 = arith.constant 0 : index
    %c0_21 = arith.constant 0 : index
    %21 = vector.load %arg9[%c0_20, %c0_21] : memref<1x2xf32, #tpu.memory_space<vmem>>, vector<1x2xf32>
    %22 = vector.broadcast %21 : vector<1x2xf32> to vector<8x2xf32>
    %23 = arith.addf %20, %22 : vector<8x2xf32>
    %c0_22 = arith.constant 0 : index
    %c0_23 = arith.constant 0 : index
    %24 = vector.load %arg10[%c0_22, %c0_23] : memref<8x2xf32, #tpu.memory_space<vmem>>, vector<8x2xf32>
    tpu.vector_store %arg10[%c0_22, %c0_23], %23 {strides = array<i32>} : memref<8x2xf32, #tpu.memory_space<vmem>>, vector<8x2xf32>,
    return
  }
  func.func @transform_0(%arg0: i32) -> (i32, i32) {
    %c0_i32 = arith.constant 0 : i32
    %c0_i32_0 = arith.constant 0 : i32
    return %arg0, %c0_i32 : i32, i32
  }
  func.func @transform_1(%arg0: i32) -> (i32, i32) {
    %c0_i32 = arith.constant 0 : i32
    %c0_i32_0 = arith.constant 0 : i32
    return %arg0, %c0_i32 : i32, i32
  }
  func.func @transform_2(%arg0: i32) -> (i32, i32) {
    %c0_i32 = arith.constant 0 : i32
    %c0_i32_0 = arith.constant 0 : i32
    %c0_i32_1 = arith.constant 0 : i32
    return %c0_i32, %c0_i32_0 : i32, i32
  }
  func.func @transform_3(%arg0: i32) -> (i32, i32) {
    %c0_i32 = arith.constant 0 : i32
    %c0_i32_0 = arith.constant 0 : i32
    %c0_i32_1 = arith.constant 0 : i32
    return %c0_i32, %c0_i32_0 : i32, i32
  }
  func.func @transform_4(%arg0: i32) -> (i32, i32) {
    %c0_i32 = arith.constant 0 : i32
    %c0_i32_0 = arith.constant 0 : i32
    %c0_i32_1 = arith.constant 0 : i32
    return %c0_i32, %c0_i32_0 : i32, i32
  }
  func.func @transform_5(%arg0: i32) -> (i32, i32) {
    %c0_i32 = arith.constant 0 : i32
    %c0_i32_0 = arith.constant 0 : i32
    %c0_i32_1 = arith.constant 0 : i32
    return %c0_i32, %c0_i32_0 : i32, i32
  }
  func.func @transform_6(%arg0: i32) -> (i32, i32) {
    %c0_i32 = arith.constant 0 : i32
    %c0_i32_0 = arith.constant 0 : i32
    %c0_i32_1 = arith.constant 0 : i32
    return %c0_i32, %c0_i32_0 : i32, i32
  }
  func.func @transform_7(%arg0: i32) -> (i32, i32) {
    %c0_i32 = arith.constant 0 : i32
    %c0_i32_0 = arith.constant 0 : i32
    %c0_i32_1 = arith.constant 0 : i32
    return %c0_i32, %c0_i32_0 : i32, i32
  }
  func.func @transform_8(%arg0: i32) -> (i32, i32) {
    %c0_i32 = arith.constant 0 : i32
    %c0_i32_0 = arith.constant 0 : i32
    %c0_i32_1 = arith.constant 0 : i32
    return %c0_i32, %c0_i32_0 : i32, i32
  }
  func.func @transform_9(%arg0: i32) -> (i32, i32) {
    %c0_i32 = arith.constant 0 : i32
    %c0_i32_0 = arith.constant 0 : i32
    return %arg0, %c0_i32 : i32, i32
  }
}

</mosaic_0001>

<llo_original>
// kernel: double_q_critic.1
$region0: #{double_q_critic.1}
  #allocation0 [shape = 'u32[]', space=smem, size = 0x4, offset = 0x4, fixed_abs, tag = 'smem constant byte address 0x4 - core index']
  #allocation1 [shape = 'u32[72,128]{1,0:T(1,128)}', space=vmem, size = 0x9000, scoped, tag = 'internal scratch']
  %s0 = inlined_call_operand.hbm [shape: f32[8,16], index: 0, kind: input, shape index: {}]
  %s1 = inlined_call_operand.hbm [shape: f32[8,8], index: 1, kind: input, shape index: {}]
  %s2 = inlined_call_operand.hbm [shape: f32[16,64], index: 2, kind: input, shape index: {}]
  %s3 = inlined_call_operand.hbm [shape: f32[8,64], index: 3, kind: input, shape index: {}]
  %s4 = inlined_call_operand.vmem [shape: f32[1,64], index: 4, kind: input, shape index: {}]
  %s5 = inlined_call_operand.vmem [shape: f32[64,64], index: 5, kind: input, shape index: {}]
  %s6 = inlined_call_operand.vmem [shape: f32[1,64], index: 6, kind: input, shape index: {}]
  %s7 = inlined_call_operand.vmem [shape: f32[64,2], index: 7, kind: input, shape index: {}]
  %s8 = inlined_call_operand.vmem [shape: f32[1,2], index: 8, kind: input, shape index: {}]
  %s9 = inlined_call_operand.vmem [shape: f32[8,2], index: 9, kind: output, shape index: {}]
  %s10 = sld [smem:[#allocation0]]
  $region62: #{double_q_critic.1} parent=0
    _
  %s12 = ssub.s32 1, %s10
  %s13 = scalar_select 0, %s12, %s10
  $region1: #{double_q_critic.1} parent=0
    #allocation2 [shape = 'u8[4096]{0}', space=vmem, size = 0x1000, scoped, tag = 'input window, operand 0, single buffered']
    #allocation3 [shape = 's32[1]{0}', space=sflag, size = 0x4, scoped, tag = 'scoped memory for double_q_critic.1']
    #allocation4 [shape = 'u8[4096]{0}', space=vmem, size = 0x1000, scoped, tag = 'input window, operand 1, single buffered']
    #allocation5 [shape = 's32[1]{0}', space=sflag, size = 0x4, scoped, tag = 'scoped memory for double_q_critic.1']
    #allocation6 [shape = 'u8[8192]{0}', space=vmem, size = 0x2000, scoped, tag = 'input window, operand 2, single buffered']
    #allocation7 [shape = 'u8[4096]{0}', space=vmem, size = 0x1000, scoped, tag = 'input window, operand 3, single buffered']
    #allocation8 [shape = 's32[1]{0}', space=sflag, size = 0x4, scoped, tag = 'scoped memory for double_q_critic.1']
    %14 = vsyncpa [#allocation3], 0
    %15 = vsyncpa [#allocation5], 0
    %16 = vsyncpa [#allocation8], 0
    // Predicated region
    $region2: #{double_q_critic.1} parent=1 // pred_check
      _
    $region3: #{double_q_critic.1} parent=1 // pred_check_branch
      %18 = sbr.rel (0) target = $region5
    $region4: #{double_q_critic.1} parent=1 // pred_region
      %20 = vsyncadd [#allocation3], 0
      %s22 = sshll.u32 %s0, 4
      %s23 = int_to_ptr.hbm [resolvable:$true] %s22
      %s24 = sshll.u32 [#allocation2], 4
      %s25 = int_to_ptr.vmem [resolvable:$true] %s24
      %27 = dma.hbm_to_vmem [thread:$0]  %s23, 128, %s25, [#allocation3]
    $region5: #{double_q_critic.1} parent=1 // pred_fallthru
      _
    // Predicated region
    $region6: #{double_q_critic.1} parent=1 // pred_check
      _
    $region7: #{double_q_critic.1} parent=1 // pred_check_branch
      %29 = sbr.rel (0) target = $region9
    $region8: #{double_q_critic.1} parent=1 // pred_region
      %31 = vsyncadd [#allocation5], 0
      %s33 = sshll.u32 %s1, 4
      %s34 = int_to_ptr.hbm [resolvable:$true] %s33
      %s35 = sshll.u32 [#allocation4], 4
      %s36 = int_to_ptr.vmem [resolvable:$true] %s35
      %38 = dma.hbm_to_vmem [thread:$0]  %s34, 128, %s36, [#allocation5]
    $region9: #{double_q_critic.1} parent=1 // pred_fallthru
      _
    // Predicated region
    $region10: #{double_q_critic.1} parent=1 // pred_check
      _
    $region11: #{double_q_critic.1} parent=1 // pred_check_branch
      %40 = sbr.rel (0) target = $region13
    $region12: #{double_q_critic.1} parent=1 // pred_region
      %42 = vsyncadd [#allocation5], 0
      %s43 = sshll.u32 %s2, 4
      %s44 = int_to_ptr.hbm [resolvable:$true] %s43
      %s45 = sshll.u32 [#allocation6], 4
      %s46 = int_to_ptr.vmem [resolvable:$true] %s45
      %51 = dma.hbm_to_vmem [thread:$0]  %s44, 256, %s46, [#allocation5], 128, 128, 8
    $region13: #{double_q_critic.1} parent=1 // pred_fallthru
      _
    // Predicated region
    $region14: #{double_q_critic.1} parent=1 // pred_check
      _
    $region15: #{double_q_critic.1} parent=1 // pred_check_branch
      %53 = sbr.rel (0) target = $region17
    $region16: #{double_q_critic.1} parent=1 // pred_region
      %55 = vsyncadd [#allocation8], 0
      %s57 = sshll.u32 %s3, 4
      %s58 = int_to_ptr.hbm [resolvable:$true] %s57
      %s59 = sshll.u32 [#allocation7], 4
      %s60 = int_to_ptr.vmem [resolvable:$true] %s59
      %62 = dma.hbm_to_vmem [thread:$0]  %s58, 128, %s60, [#allocation8]
    $region17: #{double_q_critic.1} parent=1 // pred_fallthru
      _
    // Predicated region
    $region18: #{double_q_critic.1} parent=1 // pred_check
      _
    $region19: #{double_q_critic.1} parent=1 // pred_check_branch
      %64 = sbr.rel (0) target = $region21
    $region20: #{double_q_critic.1} parent=1 // pred_region
      _
    $region21: #{double_q_critic.1} parent=1 // pred_fallthru
      _
    // Predicated region
    $region22: #{double_q_critic.1} parent=1 // pred_check
      _
    $region23: #{double_q_critic.1} parent=1 // pred_check_branch
      %66 = sbr.rel (0) target = $region25
    $region24: #{double_q_critic.1} parent=1 // pred_region
      _
    $region25: #{double_q_critic.1} parent=1 // pred_fallthru
      _
    // Predicated region
    $region26: #{double_q_critic.1} parent=1 // pred_check
      _
    $region27: #{double_q_critic.1} parent=1 // pred_check_branch
      %68 = sbr.rel (0) target = $region29
    $region28: #{double_q_critic.1} parent=1 // pred_region
      _
    $region29: #{double_q_critic.1} parent=1 // pred_fallthru
      _
    // Predicated region
    $region30: #{double_q_critic.1} parent=1 // pred_check
      _
    $region31: #{double_q_critic.1} parent=1 // pred_check_branch
      %70 = sbr.rel (0) target = $region33
    $region32: #{double_q_critic.1} parent=1 // pred_region
      _
    $region33: #{double_q_critic.1} parent=1 // pred_fallthru
      _
    // Predicated region
    $region34: #{double_q_critic.1} parent=1 // pred_check
      _
    $region35: #{double_q_critic.1} parent=1 // pred_check_branch
      %72 = sbr.rel (0) target = $region37
    $region36: #{double_q_critic.1} parent=1 // pred_region
      _
    $region37: #{double_q_critic.1} parent=1 // pred_fallthru
      _
    // Predicated region
    $region38: #{double_q_critic.1} parent=1 // pred_check
      _
    $region39: #{double_q_critic.1} parent=1 // pred_check_branch
      %74 = sbr.rel (0) target = $region41
    $region40: #{double_q_critic.1} parent=1 // pred_region
      %76 = dma.done [#allocation3], 128
    $region41: #{double_q_critic.1} parent=1 // pred_fallthru
      _
    // Predicated region
    $region42: #{double_q_critic.1} parent=1 // pred_check
      _
    $region43: #{double_q_critic.1} parent=1 // pred_check_branch
      %78 = sbr.rel (0) target = $region45
    $region44: #{double_q_critic.1} parent=1 // pred_region
      %80 = dma.done [#allocation5], 128
    $region45: #{double_q_critic.1} parent=1 // pred_fallthru
      _
    // Predicated region
    $region46: #{double_q_critic.1} parent=1 // pred_check
      _
    $region47: #{double_q_critic.1} parent=1 // pred_check_branch
      %82 = sbr.rel (0) target = $region49
    $region48: #{double_q_critic.1} parent=1 // pred_region
      %84 = dma.done [#allocation5], 256
    $region49: #{double_q_critic.1} parent=1 // pred_fallthru
      _
    // Predicated region
    $region50: #{double_q_critic.1} parent=1 // pred_check
      _
    $region51: #{double_q_critic.1} parent=1 // pred_check_branch
      %86 = sbr.rel (0) target = $region53
    $region52: #{double_q_critic.1} parent=1 // pred_region
      %88 = dma.done [#allocation8], 128
    $region53: #{double_q_critic.1} parent=1 // pred_fallthru
      _
    %v89 = vld [vmem:[#allocation2] sm:$0xff]
    %v90 = vld [vmem:[#allocation4] sm:$0xff]
    %v91 = vld [vmem:[#allocation6] sm:$0xff]
    %v92 = vld [vmem:[#allocation6 + $0x8] sm:$0xff]
    %v93 = vld [vmem:[#allocation7] sm:$0xff]
    %vm94 = vcmask 64512
    %v96 = vsel %vm94, %v90, 0
    %98 = vmatpush.msra.mxu0 0.0
    %99 = vmatpush.msra.mxu0 0.0
    %100 = vmatpush.msra.mxu0 0.0
    %101 = vmatpush.msra.mxu0 0.0
    %102 = vmatpush.msra.mxu0 0.0
    %103 = vmatpush.msra.mxu0 0.0
    %104 = vmatpush.msra.mxu0 0.0
    %105 = vmatpush.msra.mxu0 0.0
    %106 = vmatpush.msra.mxu0 0.0
    %107 = vmatpush.msra.mxu0 0.0
    %108 = vmatpush.msra.mxu0 0.0
    %109 = vmatpush.msra.mxu0 0.0
    %110 = vmatpush.msra.mxu0 0.0
    %111 = vmatpush.msra.mxu0 0.0
    %112 = vmatpush.msra.mxu0 0.0
    %113 = vmatpush.msra.mxu0 %v93
    %114 = vmatmul.f32.gmra.mxu0 %v96
    %v115 = vpop.f32.mrf.mxu0
    %v116 = vadd.f32 0.0, %v115
    %117 = vdwg.mxu0
    %vm118 = vcmask 130048
    %v120 = vsel %vm118, %v89, 0
    %122 = vmatpush.msra.mxu0 0.0
    %123 = vmatpush.msra.mxu0 0.0
    %124 = vmatpush.msra.mxu0 0.0
    %125 = vmatpush.msra.mxu0 0.0
    %126 = vmatpush.msra.mxu0 0.0
    %127 = vmatpush.msra.mxu0 0.0
    %128 = vmatpush.msra.mxu0 0.0
    %129 = vmatpush.msra.mxu0 0.0
    %130 = vmatpush.msra.mxu0 0.0
    %131 = vmatpush.msra.mxu0 0.0
    %132 = vmatpush.msra.mxu0 0.0
    %133 = vmatpush.msra.mxu0 0.0
    %134 = vmatpush.msra.mxu0 0.0
    %135 = vmatpush.msra.mxu0 0.0
    %136 = vmatpush.msra.mxu0 %v92
    %137 = vmatpush.msra.mxu0 %v91
    %138 = vmatmul.f32.gmra.mxu0 %v120
    %v139 = vpop.f32.mrf.mxu0
    %v140 = vadd.f32 %v116, %v139
    %141 = vdwg.mxu0
    %v142 = vld [vmem:[%s4] sm:$0x1]
    %v144 = vperm.slane %v142, 0
    %v146 = vadd.f32 %v140, %v144
    %v147 = vmax.f32 %v146, 0.0
    %v148 = vld [vmem:[%s5] sm:$0xff]
    %v149 = vld [vmem:[%s5 + $0x8] sm:$0xff]
    %v150 = vld [vmem:[%s5 + $0x10] sm:$0xff]
    %v151 = vld [vmem:[%s5 + $0x18] sm:$0xff]
    %v152 = vld [vmem:[%s5 + $0x20] sm:$0xff]
    %v153 = vld [vmem:[%s5 + $0x28] sm:$0xff]
    %v154 = vld [vmem:[%s5 + $0x30] sm:$0xff]
    %v155 = vld [vmem:[%s5 + $0x38] sm:$0xff]
    %v156 = vld [vmem:[%s6] sm:$0x1]
    %v158 = vperm.slane %v156, 0
    %vm160 = vcmask 523264
    %v162 = vsel %vm160, %v147, 0
    %164 = vmatpush.msra.mxu0 0.0
    %165 = vmatpush.msra.mxu0 0.0
    %166 = vmatpush.msra.mxu0 0.0
    %167 = vmatpush.msra.mxu0 0.0
    %168 = vmatpush.msra.mxu0 0.0
    %169 = vmatpush.msra.mxu0 0.0
    %170 = vmatpush.msra.mxu0 0.0
    %171 = vmatpush.msra.mxu0 0.0
    %172 = vmatpush.msra.mxu0 %v155
    %173 = vmatpush.msra.mxu0 %v154
    %174 = vmatpush.msra.mxu0 %v153
    %175 = vmatpush.msra.mxu0 %v152
    %176 = vmatpush.msra.mxu0 %v151
    %177 = vmatpush.msra.mxu0 %v150
    %178 = vmatpush.msra.mxu0 %v149
    %179 = vmatpush.msra.mxu0 %v148
    %180 = vmatmul.f32.gmra.mxu0 %v162
    %v181 = vpop.f32.mrf.mxu0
    %v182 = vadd.f32 %v158, %v181
    %183 = vdwg.mxu0
    %v184 = vmax.f32 %v182, 0.0
    %v185 = vld [vmem:[%s7] sm:$0xff]
    %v186 = vld [vmem:[%s7 + $0x8] sm:$0xff]
    %v187 = vld [vmem:[%s7 + $0x10] sm:$0xff]
    %v188 = vld [vmem:[%s7 + $0x18] sm:$0xff]
    %v189 = vld [vmem:[%s7 + $0x20] sm:$0xff]
    %v190 = vld [vmem:[%s7 + $0x28] sm:$0xff]
    %v191 = vld [vmem:[%s7 + $0x30] sm:$0xff]
    %v192 = vld [vmem:[%s7 + $0x38] sm:$0xff]
    %v193 = vld [vmem:[%s8] sm:$0x1]
    %v195 = vperm.slane %v193, 0
    %v198 = vsel %vm160, %v184, 0
    %200 = vmatpush.msra.mxu0 0.0
    %201 = vmatpush.msra.mxu0 0.0
    %202 = vmatpush.msra.mxu0 0.0
    %203 = vmatpush.msra.mxu0 0.0
    %204 = vmatpush.msra.mxu0 0.0
    %205 = vmatpush.msra.mxu0 0.0
    %206 = vmatpush.msra.mxu0 0.0
    %207 = vmatpush.msra.mxu0 0.0
    %208 = vmatpush.msra.mxu0 %v192
    %209 = vmatpush.msra.mxu0 %v191
    %210 = vmatpush.msra.mxu0 %v190
    %211 = vmatpush.msra.mxu0 %v189
    %212 = vmatpush.msra.mxu0 %v188
    %213 = vmatpush.msra.mxu0 %v187
    %214 = vmatpush.msra.mxu0 %v186
    %215 = vmatpush.msra.mxu0 %v185
    %216 = vmatmul.f32.gmra.mxu0 %v198
    %v217 = vpop.f32.mrf.mxu0
    %v218 = vadd.f32 %v195, %v217
    %219 = vdwg.mxu0
    %vm220 = vcmask 15360
    %221 = vst.msk [vmem:[%s9] sm:$0xff] %vm220, %v218
    // Predicated region
    $region54: #{double_q_critic.1} parent=1 // pred_check
      _
    $region55: #{double_q_critic.1} parent=1 // pred_check_branch
      %223 = sbr.rel (0) target = $region57
    $region56: #{double_q_critic.1} parent=1 // pred_region
      _
    $region57: #{double_q_critic.1} parent=1 // pred_fallthru
      _
    // Predicated region
    $region58: #{double_q_critic.1} parent=1 // pred_check
      _
    $region59: #{double_q_critic.1} parent=1 // pred_check_branch
      %225 = sbr.rel (0) target = $region61
    $region60: #{double_q_critic.1} parent=1 // pred_region
      _
    $region61: #{double_q_critic.1} parent=1 // pred_fallthru
      _
    %226 = vsyncpa [#allocation3], 1
    %227 = vsyncpa [#allocation5], 1
    %228 = vsyncpa [#allocation8], 1

</llo_original>
